<compile_context>
chip_gen: v6e
topology: v6e:2x2x1
jax: 0.10.0
libtpu: 0.0.40
codegen_flags: <defaults>
</compile_context>

<pallas_src>
import math

import jax
import jax.numpy as jnp
from jax.experimental import pallas as pl
from jax.experimental.pallas import tpu as pltpu


def _round_up(x, m):
    return ((x + m - 1) // m) * m


def _ca_kernel(x_ref, w1_ref, b1_ref, w2_ref, b2_ref, o_ref):
    # x_ref:  (C_in, T)    bf16   (pixels on lanes)
    # w1_ref: (HID, C_in)  bf16
    # b1_ref: (HID, 1)     f32
    # w2_ref: (C_out, HID) bf16
    # b2_ref: (C_out, 1)   f32
    # o_ref:  (C_out, T)   f32
    h = jnp.dot(w1_ref[...], x_ref[...], preferred_element_type=jnp.float32)
    h = jnp.maximum(h + b1_ref[...], 0.0)                       # bias + ReLU (f32)
    y = jnp.dot(w2_ref[...], h.astype(jnp.bfloat16),
                preferred_element_type=jnp.float32)
    o_ref[...] = (y + b2_ref[...]).astype(o_ref.dtype)


def ca_model_forward(x_nchw, w1, b1, w2, b2, *, tile_t=2048):
    """CAModel.forward: conv2(relu(conv1(x))) with 1x1 convs.

    x_nchw: (N, C_in, H, W) float32
    w1: (HID, C_in), b1: (HID,)       -- conv1 weight/bias (PyTorch layout, 1x1 squeezed)
    w2: (C_out, HID), b2: (C_out,)    -- conv2 weight/bias
    Returns (N, C_out, H, W) float32.
    """
    N, C_in, H, W = x_nchw.shape
    HID = w1.shape[0]
    C_out = w2.shape[0]
    HW = H * W

    # Pixels on the lane axis; NCHW handled directly (reshape only, no transpose).
    x3 = x_nchw.reshape(N, C_in, HW)

    # Pick a large lane tile (multiple of 128); pad ragged HW with zeros.
    tile = min(tile_t, _round_up(HW, 128))
    HW_pad = _round_up(HW, tile)
    if HW_pad != HW:
        x3 = jnp.pad(x3, ((0, 0), (0, 0), (0, HW_pad - HW)))

    # bf16 data stream (halves DMA bytes for the dominant x read); f32 accumulate.
    x_bf = x3.astype(jnp.bfloat16)
    w1_bf = w1.astype(jnp.bfloat16)                  # (HID, C_in)
    w2_bf = w2.astype(jnp.bfloat16)                  # (C_out, HID)
    b1_c = b1.reshape(HID, 1).astype(jnp.float32)
    b2_c = b2.reshape(C_out, 1).astype(jnp.float32)

    grid = (N, HW_pad // tile)

    out3 = pl.pallas_call(
        _ca_kernel,
        out_shape=jax.ShapeDtypeStruct((N, C_out, HW_pad), jnp.float32),
        grid_spec=pltpu.PrefetchScalarGridSpec(
            num_scalar_prefetch=0,
            grid=grid,
            in_specs=[
                # x tile: (C_in, T) with pixels dense on lanes
                pl.BlockSpec((pl.Squeezed(), C_in, tile), lambda n, t: (n, 0, t)),
                # small params: full blocks, constant index_map -> stay in VMEM
                pl.BlockSpec((HID, C_in), lambda n, t: (0, 0)),
                pl.BlockSpec((HID, 1), lambda n, t: (0, 0)),
                pl.BlockSpec((C_out, HID), lambda n, t: (0, 0)),
                pl.BlockSpec((C_out, 1), lambda n, t: (0, 0)),
            ],
            out_specs=pl.BlockSpec((pl.Squeezed(), C_out, tile),
                                   lambda n, t: (n, 0, t)),
        ),
        compiler_params=pltpu.CompilerParams(
            dimension_semantics=("parallel", "parallel"),
            vmem_limit_bytes=32 * 1024 * 1024,
        ),
    )(x_bf, w1_bf, b1_c, w2_bf, b2_c)

    if HW_pad != HW:
        out3 = out3[:, :, :HW]
    return out3.reshape(N, C_out, H, W)


def init_params(env_d, hidden=192, seed=0, zero_conv2=True):
    """Parameters in PyTorch layout: w=(out, in), b=(out,).

    The module zero-initializes conv2 (weight & bias); set zero_conv2=False to
    get nonzero conv2 params (used by the non-vacuous self-test)."""
    key = jax.random.PRNGKey(seed)
    k1, k2, k3, k4 = jax.random.split(key, 4)
    c_in = env_d * 3
    bound1 = 1.0 / math.sqrt(c_in)
    w1 = jax.random.uniform(k1, (hidden, c_in), jnp.float32, -bound1, bound1)
    b1 = jax.random.uniform(k2, (hidden,), jnp.float32, -bound1, bound1)
    if zero_conv2:
        w2 = jnp.zeros((env_d, hidden), jnp.float32)
        b2 = jnp.zeros((env_d,), jnp.float32)
    else:
        bound2 = 1.0 / math.sqrt(hidden)
        w2 = jax.random.uniform(k3, (env_d, hidden), jnp.float32, -bound2, bound2)
        b2 = jax.random.uniform(k4, (env_d,), jnp.float32, -bound2, bound2)
    return w1, b1, w2, b2


if __name__ == "__main__":
    env_d = 4
    N, H, W = 2, 16, 16
    C_in = env_d * 3  # 12

    key = jax.random.PRNGKey(0)
    x = jax.random.normal(key, (N, C_in, H, W), jnp.float32)

    # Non-vacuous check: nonzero conv2 params so the whole path is exercised.
    w1, b1, w2, b2 = init_params(env_d, zero_conv2=False)

    out = ca_model_forward(x, w1, b1, w2, b2)
    out = jax.block_until_ready(out)
    assert out.shape == (N, env_d, H, W)

    # Pure-JAX reference with the same bf16 input/weight casts + f32 accumulation.
    xb = x.astype(jnp.bfloat16).astype(jnp.float32)
    w1b = w1.astype(jnp.bfloat16).astype(jnp.float32)
    w2b = w2.astype(jnp.bfloat16).astype(jnp.float32)
    h_ref = jnp.einsum("oc,nchw->nohw", w1b, xb) + b1[None, :, None, None]
    h_ref = jnp.maximum(h_ref, 0.0)
    h_ref = h_ref.astype(jnp.bfloat16).astype(jnp.float32)
    y_ref = jnp.einsum("oc,nchw->nohw", w2b, h_ref) + b2[None, :, None, None]
    assert jnp.allclose(out, y_ref, atol=2e-2, rtol=2e-2), "mismatch vs reference"

    # Module's actual init path (conv2 zeroed) -> output must be exactly zero.
    w1z, b1z, w2z, b2z = init_params(env_d, zero_conv2=True)
    out_zero = jax.block_until_ready(ca_model_forward(x, w1z, b1z, w2z, b2z))
    assert jnp.array_equal(out_zero, jnp.zeros_like(out_zero))

    print("KERNEL_OK")
</pallas_src>

<mosaic_0001>
module attributes {stable_mosaic.version = 11 : i64} {
  func.func @_ca_kernel(%arg0: i32, %arg1: i32, %arg2: memref<1x12x256xbf16, #tpu.memory_space<vmem>>, %arg3: memref<192x12xbf16, #tpu.memory_space<vmem>>, %arg4: memref<192x1xf32, #tpu.memory_space<vmem>>, %arg5: memref<4x192xbf16, #tpu.memory_space<vmem>>, %arg6: memref<4x1xf32, #tpu.memory_space<vmem>>, %arg7: memref<1x4x256xf32, #tpu.memory_space<vmem>>) attributes {dimension_semantics = [#tpu.dimension_semantics<parallel>, #tpu.dimension_semantics<parallel>], iteration_bounds = array<i64: 2, 1>, scalar_prefetch = 0 : i64, scratch_operands = 0 : i64, tpu.core_type = #tpu.core_type<tc>, window_params = [{transform_indices = @transform_0, window_bounds = array<i64: 1, 12, 256>}, {pipeline_mode = #tpu.pipeline_mode<synchronous>, transform_indices = @transform_1, window_bounds = array<i64: 192, 12>}, {pipeline_mode = #tpu.pipeline_mode<synchronous>, transform_indices = @transform_2, window_bounds = array<i64: 192, 1>}, {pipeline_mode = #tpu.pipeline_mode<synchronous>, transform_indices = @transform_3, window_bounds = array<i64: 4, 192>}, {pipeline_mode = #tpu.pipeline_mode<synchronous>, transform_indices = @transform_4, window_bounds = array<i64: 4, 1>}, {transform_indices = @transform_5, window_bounds = array<i64: 1, 4, 256>}]} {
    %c0 = arith.constant 0 : index
    %c0_0 = arith.constant 0 : index
    %0 = vector.load %arg3[%c0, %c0_0] : memref<192x12xbf16, #tpu.memory_space<vmem>>, vector<192x12xbf16>
    %c0_1 = arith.constant 0 : index
    %c0_2 = arith.constant 0 : index
    %c0_3 = arith.constant 0 : index
    %1 = vector.load %arg2[%c0_1, %c0_2, %c0_3] : memref<1x12x256xbf16, #tpu.memory_space<vmem>>, vector<1x12x256xbf16>
    %2 = vector.shape_cast %1 : vector<1x12x256xbf16> to vector<12x256xbf16>
    %cst = arith.constant dense<0.000000e+00> : vector<192x256xf32>
    %3 = tpu.matmul %0, %2, %cst {dimension_numbers = #tpu.dot_dimension_numbers<[1], [0], [0], [1], [0, 0, 1, 1], [], []>} : vector<192x12xbf16>, vector<12x256xbf16>, vector<192x256xf32> -> vector<192x256xf32>
    %c0_4 = arith.constant 0 : index
    %c0_5 = arith.constant 0 : index
    %4 = vector.load %arg4[%c0_4, %c0_5] : memref<192x1xf32, #tpu.memory_space<vmem>>, vector<192x1xf32>
    %5 = vector.broadcast %4 : vector<192x1xf32> to vector<192x256xf32>
    %6 = arith.addf %3, %5 : vector<192x256xf32>
    %cst_6 = arith.constant 0.000000e+00 : f32
    %7 = vector.broadcast %cst_6 : f32 to vector<192x256xf32>
    %8 = arith.maximumf %6, %7 : vector<192x256xf32>
    %c0_7 = arith.constant 0 : index
    %c0_8 = arith.constant 0 : index
    %9 = vector.load %arg5[%c0_7, %c0_8] : memref<4x192xbf16, #tpu.memory_space<vmem>>, vector<4x192xbf16>
    %10 = arith.truncf %8 : vector<192x256xf32> to vector<192x256xbf16>
    %cst_9 = arith.constant dense<0.000000e+00> : vector<4x256xf32>
    %11 = tpu.matmul %9, %10, %cst_9 {dimension_numbers = #tpu.dot_dimension_numbers<[1], [0], [0], [1], [0, 0, 1, 1], [], []>} : vector<4x192xbf16>, vector<192x256xbf16>, vector<4x256xf32> -> vector<4x256xf32>
    %c0_10 = arith.constant 0 : index
    %c0_11 = arith.constant 0 : index
    %12 = vector.load %arg6[%c0_10, %c0_11] : memref<4x1xf32, #tpu.memory_space<vmem>>, vector<4x1xf32>
    %13 = vector.broadcast %12 : vector<4x1xf32> to vector<4x256xf32>
    %14 = arith.addf %11, %13 : vector<4x256xf32>
    %c0_12 = arith.constant 0 : index
    %c0_13 = arith.constant 0 : index
    %c0_14 = arith.constant 0 : index
    %15 = vector.load %arg7[%c0_12, %c0_13, %c0_14] : memref<1x4x256xf32, #tpu.memory_space<vmem>>, vector<1x4x256xf32>
    %16 = vector.shape_cast %15 : vector<1x4x256xf32> to vector<4x256xf32>
    %17 = vector.shape_cast %14 : vector<4x256xf32> to vector<1x4x256xf32>
    tpu.vector_store %arg7[%c0_12, %c0_13, %c0_14], %17 {strides = array<i32>} : memref<1x4x256xf32, #tpu.memory_space<vmem>>, vector<1x4x256xf32>,
    return
  }
  func.func @transform_0(%arg0: i32, %arg1: i32) -> (i32, i32, i32) {
    %c0_i32 = arith.constant 0 : i32
    %c0_i32_0 = arith.constant 0 : i32
    return %arg0, %c0_i32, %arg1 : i32, i32, i32
  }
  func.func @transform_1(%arg0: i32, %arg1: i32) -> (i32, i32) {
    %c0_i32 = arith.constant 0 : i32
    %c0_i32_0 = arith.constant 0 : i32
    %c0_i32_1 = arith.constant 0 : i32
    return %c0_i32, %c0_i32_0 : i32, i32
  }
  func.func @transform_2(%arg0: i32, %arg1: i32) -> (i32, i32) {
    %c0_i32 = arith.constant 0 : i32
    %c0_i32_0 = arith.constant 0 : i32
    %c0_i32_1 = arith.constant 0 : i32
    return %c0_i32, %c0_i32_0 : i32, i32
  }
  func.func @transform_3(%arg0: i32, %arg1: i32) -> (i32, i32) {
    %c0_i32 = arith.constant 0 : i32
    %c0_i32_0 = arith.constant 0 : i32
    %c0_i32_1 = arith.constant 0 : i32
    return %c0_i32, %c0_i32_0 : i32, i32
  }
  func.func @transform_4(%arg0: i32, %arg1: i32) -> (i32, i32) {
    %c0_i32 = arith.constant 0 : i32
    %c0_i32_0 = arith.constant 0 : i32
    %c0_i32_1 = arith.constant 0 : i32
    return %c0_i32, %c0_i32_0 : i32, i32
  }
  func.func @transform_5(%arg0: i32, %arg1: i32) -> (i32, i32, i32) {
    %c0_i32 = arith.constant 0 : i32
    %c0_i32_0 = arith.constant 0 : i32
    return %arg0, %c0_i32, %arg1 : i32, i32, i32
  }
}

</mosaic_0001>

<llo_original>
// kernel: tpu_custom_call.1
$region0: #{tpu_custom_call.1}
  #allocation0 [shape = 'u32[]', space=smem, size = 0x4, offset = 0x4, fixed_abs, tag = 'smem constant byte address 0x4 - core index']
  #allocation1 [shape = 'u32[144,128]{1,0:T(1,128)}', space=vmem, size = 0x12000, scoped, tag = 'internal scratch']
  %s0 = inlined_call_operand.vmem [shape: bf16[2,12,256], index: 0, kind: input, shape index: {}]
  %s1 = inlined_call_operand.vmem [shape: bf16[192,12], index: 1, kind: input, shape index: {}]
  %s2 = inlined_call_operand.vmem [shape: f32[192,1], index: 2, kind: input, shape index: {}]
  %s3 = inlined_call_operand.vmem [shape: bf16[4,192], index: 3, kind: input, shape index: {}]
  %s4 = inlined_call_operand.vmem [shape: f32[4,1], index: 4, kind: input, shape index: {}]
  %s5 = inlined_call_operand.hbm [shape: f32[2,4,256], index: 5, kind: output, shape index: {}]
  %s6 = sld [smem:[#allocation0]]
  $region53: #{tpu_custom_call.1} parent=0
    _
  %s8 = ssub.s32 1, %s6
  %s9 = scalar_select 0, %s8, %s6
  $region1: #{tpu_custom_call.1} parent=0
    #allocation2 [shape = 'u8[8192]{0}', space=vmem, size = 0x2000, scoped, tag = 'output window, operand 0']
    #allocation3 [shape = 's32[2]{0}', space=sflag, size = 0x8, scoped, tag = 'scoped memory for tpu_custom_call.1']
    %10 = vsyncpa [#allocation3], 0
    %s11 = scalar_lea.sflag [#allocation3], 1
    %12 = vsyncpa %s11, 0
    loop: start=0, step=1, limit=4
    $region2: #{tpu_custom_call.1} parent=1 // loop_pre_header
      _
    $region3: #{tpu_custom_call.1} parent=1 // loop_header
      %s14 = sphi 0, %s18
      %p15 = scmp.ge.s32.totalorder %s14, 4
      %s21 = sphi 0, %s33
      %s22 = sphi 0, %s29
      %s23 = sphi 0, %s21
      %s24 = sphi 0, %s22
      %s25 = sphi 0, %s23
      %s26 = sphi 0, %s24
      %s38 = sphi 0, %s40
      %s41 = sphi 0, %s38
      %s42 = sphi 0, %s41
      %s58 = sphi 0, %s42
      %s62 = sphi 0, %s62
      %s64 = sphi 0, %s62
      %s65 = sphi 0, %s64
      %s79 = sphi 0, %s65
      %s83 = sphi 0, %s83
      %s85 = sphi 0, %s83
      %s86 = sphi 0, %s85
      %s100 = sphi 0, %s86
      %s104 = sphi 0, %s104
      %s106 = sphi 0, %s104
      %s107 = sphi 0, %s106
      %s121 = sphi 0, %s107
      %s125 = sphi 0, %s125
      %s127 = sphi 0, %s125
      %s128 = sphi 0, %s127
      %s142 = sphi 0, %s128
      %s150 = sphi 0, %s152
      %s153 = sphi 0, %s150
      %s154 = sphi 0, %s153
      %s170 = sphi 0, %s154
    $region4: #{tpu_custom_call.1} parent=1 // loop_header_branch
      %17 = sbr.rel (%p15) target = $region8
    $region5: #{tpu_custom_call.1} parent=1 // loop_body
      %s19 = ssub.s32 %s14, 1
      %s20 = ssub.s32 %s14, 2
      %s27 = sadd.s32 1, %s22
      %p28 = scmp.ge.s32.totalorder %s27, 1
      %s29 = scalar_select %p28, 0, %s27
      %s30 = sadd.s32 1, %s21
      %s31 = scalar_select %p28, %s30, %s21
      %p32 = scmp.ge.s32.totalorder %s31, 2
      %s33 = scalar_select %p32, 0, %s31
      %s34 = ssub.s32 %s21, %s33
      %s35 = ssub.s32 %s22, %s29
      %s36 = sor.u32 %s34, %s35
      %p37 = scmp.eq.s32.totalorder %s36, 0
      %s39 = sadd.s32 %s38, 1
      %s40 = scalar_select %p37, %s38, %s39
      %p43 = pneg %p37
      %p44 = scmp.eq.s32.totalorder %s14, 1
      %p45 = por %p43, %p44
      %p46 = scmp.ne.s32.totalorder %s38, %s41
      %p47 = scmp.eq.s32.totalorder %s14, 0
      %p48 = por %p46, %p47
      %p49 = scmp.ne.s32.totalorder %s38, %s41
      %p50 = scmp.eq.s32.totalorder %s19, 1
      %p51 = por %p49, %p50
      %p52 = scmp.ne.s32.totalorder %s41, %s42
      %p53 = scmp.eq.s32.totalorder %s19, 0
      %p54 = por %p52, %p53
      %p55 = scmp.ne.s32.totalorder %s41, %s42
      %p56 = scmp.eq.s32.totalorder %s20, 1
      %p57 = por %p55, %p56
      %p59 = scmp.ne.s32.totalorder %s42, %s58
      %p60 = scmp.eq.s32.totalorder %s20, 0
      %p61 = por %p59, %p60
      %s63 = sadd.s32 %s62, 1
      %p66 = scmp.eq.s32.totalorder %s14, 1
      %p67 = scmp.ne.s32.totalorder %s62, %s64
      %p68 = scmp.eq.s32.totalorder %s14, 0
      %p69 = por %p67, %p68
      %p70 = scmp.ne.s32.totalorder %s62, %s64
      %p71 = scmp.eq.s32.totalorder %s19, 1
      %p72 = por %p70, %p71
      %p73 = scmp.ne.s32.totalorder %s64, %s65
      %p74 = scmp.eq.s32.totalorder %s19, 0
      %p75 = por %p73, %p74
      %p76 = scmp.ne.s32.totalorder %s64, %s65
      %p77 = scmp.eq.s32.totalorder %s20, 1
      %p78 = por %p76, %p77
      %p80 = scmp.ne.s32.totalorder %s65, %s79
      %p81 = scmp.eq.s32.totalorder %s20, 0
      %p82 = por %p80, %p81
      %s84 = sadd.s32 %s83, 1
      %p87 = scmp.eq.s32.totalorder %s14, 1
      %p88 = scmp.ne.s32.totalorder %s83, %s85
      %p89 = scmp.eq.s32.totalorder %s14, 0
      %p90 = por %p88, %p89
      %p91 = scmp.ne.s32.totalorder %s83, %s85
      %p92 = scmp.eq.s32.totalorder %s19, 1
      %p93 = por %p91, %p92
      %p94 = scmp.ne.s32.totalorder %s85, %s86
      %p95 = scmp.eq.s32.totalorder %s19, 0
      %p96 = por %p94, %p95
      %p97 = scmp.ne.s32.totalorder %s85, %s86
      %p98 = scmp.eq.s32.totalorder %s20, 1
      %p99 = por %p97, %p98
      %p101 = scmp.ne.s32.totalorder %s86, %s100
      %p102 = scmp.eq.s32.totalorder %s20, 0
      %p103 = por %p101, %p102
      %s105 = sadd.s32 %s104, 1
      %p108 = scmp.eq.s32.totalorder %s14, 1
      %p109 = scmp.ne.s32.totalorder %s104, %s106
      %p110 = scmp.eq.s32.totalorder %s14, 0
      %p111 = por %p109, %p110
      %p112 = scmp.ne.s32.totalorder %s104, %s106
      %p113 = scmp.eq.s32.totalorder %s19, 1
      %p114 = por %p112, %p113
      %p115 = scmp.ne.s32.totalorder %s106, %s107
      %p116 = scmp.eq.s32.totalorder %s19, 0
      %p117 = por %p115, %p116
      %p118 = scmp.ne.s32.totalorder %s106, %s107
      %p119 = scmp.eq.s32.totalorder %s20, 1
      %p120 = por %p118, %p119
      %p122 = scmp.ne.s32.totalorder %s107, %s121
      %p123 = scmp.eq.s32.totalorder %s20, 0
      %p124 = por %p122, %p123
      %s126 = sadd.s32 %s125, 1
      %p129 = scmp.eq.s32.totalorder %s14, 1
      %p130 = scmp.ne.s32.totalorder %s125, %s127
      %p131 = scmp.eq.s32.totalorder %s14, 0
      %p132 = por %p130, %p131
      %p133 = scmp.ne.s32.totalorder %s125, %s127
      %p134 = scmp.eq.s32.totalorder %s19, 1
      %p135 = por %p133, %p134
      %p136 = scmp.ne.s32.totalorder %s127, %s128
      %p137 = scmp.eq.s32.totalorder %s19, 0
      %p138 = por %p136, %p137
      %p139 = scmp.ne.s32.totalorder %s127, %s128
      %p140 = scmp.eq.s32.totalorder %s20, 1
      %p141 = por %p139, %p140
      %p143 = scmp.ne.s32.totalorder %s128, %s142
      %p144 = scmp.eq.s32.totalorder %s20, 0
      %p145 = por %p143, %p144
      %s146 = ssub.s32 %s21, %s33
      %s147 = ssub.s32 %s22, %s29
      %s148 = sor.u32 %s146, %s147
      %p149 = scmp.eq.s32.totalorder %s148, 0
      %s151 = sadd.s32 %s150, 1
      %s152 = scalar_select %p149, %s150, %s151
      %p155 = pneg %p149
      %p156 = scmp.eq.s32.totalorder %s14, 1
      %p157 = por %p155, %p156
      %p158 = scmp.ne.s32.totalorder %s150, %s153
      %p159 = scmp.eq.s32.totalorder %s14, 0
      %p160 = por %p158, %p159
      %p161 = scmp.ne.s32.totalorder %s150, %s153
      %p162 = scmp.eq.s32.totalorder %s19, 1
      %p163 = por %p161, %p162
      %p164 = scmp.ne.s32.totalorder %s153, %s154
      %p165 = scmp.eq.s32.totalorder %s19, 0
      %p166 = por %p164, %p165
      %p167 = scmp.ne.s32.totalorder %s153, %s154
      %p168 = scmp.eq.s32.totalorder %s20, 1
      %p169 = por %p167, %p168
      %p171 = scmp.ne.s32.totalorder %s154, %s170
      %p172 = scmp.eq.s32.totalorder %s20, 0
      %p173 = por %p171, %p172
      %p174 = scmp.le.s32.totalorder 1, %s14
      %p175 = scmp.lt.s32.totalorder %s14, 3
      %p176 = pnand %p174, %p175
      %p177 = pneg %p176
      // Predicated region
      $region9: #{tpu_custom_call.1} parent=5 // pred_check
        _
      $region10: #{tpu_custom_call.1} parent=5 // pred_check_branch
        %179 = sbr.rel (%p176) target = $region12
      $region11: #{tpu_custom_call.1} parent=5 // pred_region
        %s180 = ssub.s32 %s14, 1
        // Predicated region
        $region13: #{tpu_custom_call.1} parent=11 // pred_check
          %p181 = pneg %p75
        $region14: #{tpu_custom_call.1} parent=11 // pred_check_branch
          %183 = sbr.rel (%p181) target = $region16
        $region15: #{tpu_custom_call.1} parent=11 // pred_region
          _
        $region16: #{tpu_custom_call.1} parent=11 // pred_fallthru
          _
        // Predicated region
        $region17: #{tpu_custom_call.1} parent=11 // pred_check
          %p184 = pneg %p96
        $region18: #{tpu_custom_call.1} parent=11 // pred_check_branch
          %186 = sbr.rel (%p184) target = $region20
        $region19: #{tpu_custom_call.1} parent=11 // pred_region
          _
        $region20: #{tpu_custom_call.1} parent=11 // pred_fallthru
          _
        // Predicated region
        $region21: #{tpu_custom_call.1} parent=11 // pred_check
          %p187 = pneg %p117
        $region22: #{tpu_custom_call.1} parent=11 // pred_check_branch
          %189 = sbr.rel (%p187) target = $region24
        $region23: #{tpu_custom_call.1} parent=11 // pred_region
          _
        $region24: #{tpu_custom_call.1} parent=11 // pred_fallthru
          _
        // Predicated region
        $region25: #{tpu_custom_call.1} parent=11 // pred_check
          %p190 = pneg %p138
        $region26: #{tpu_custom_call.1} parent=11 // pred_check_branch
          %192 = sbr.rel (%p190) target = $region28
        $region27: #{tpu_custom_call.1} parent=11 // pred_region
          _
        $region28: #{tpu_custom_call.1} parent=11 // pred_fallthru
          _
      $region12: #{tpu_custom_call.1} parent=5 // pred_fallthru
        _
      %p193 = scmp.lt.s32.totalorder %s14, 2
      // Predicated region
      $region29: #{tpu_custom_call.1} parent=5 // pred_check
        %p194 = pneg %p193
      $region30: #{tpu_custom_call.1} parent=5 // pred_check_branch
        %196 = sbr.rel (%p194) target = $region32
      $region31: #{tpu_custom_call.1} parent=5 // pred_region
        // Predicated region
        $region33: #{tpu_custom_call.1} parent=31 // pred_check
          %p197 = pneg %p48
        $region34: #{tpu_custom_call.1} parent=31 // pred_check_branch
          %199 = sbr.rel (%p197) target = $region36
        $region35: #{tpu_custom_call.1} parent=31 // pred_region
          %s200 = smul.u32 2, %s22
          %p201 = scmp.lt.s32.totalorder %s21, 1
          %s202 = scalar_select %p201, %s21, 1
          %p203 = scmp.lt.s32.totalorder %s200, 1
          %s204 = scalar_select %p203, %s200, 1
          %s205 = smul.addr %s202, 4
          %s206 = sadd.s32 %s204, %s205
          %s207 = smul.addr %s206, 4
          %s208 = scalar_lea.vmem %s0, %s207
          %s209 = smul.u32 2, %s22
        $region36: #{tpu_custom_call.1} parent=31 // pred_fallthru
          _
      $region32: #{tpu_custom_call.1} parent=5 // pred_fallthru
        _
      %p210 = scmp.le.s32.totalorder 1, %s14
      %p211 = scmp.lt.s32.totalorder %s14, 3
      %p212 = pnand %p210, %p211
      %p213 = pneg %p212
      // Predicated region
      $region37: #{tpu_custom_call.1} parent=5 // pred_check
        _
      $region38: #{tpu_custom_call.1} parent=5 // pred_check_branch
        %215 = sbr.rel (%p212) target = $region40
      $region39: #{tpu_custom_call.1} parent=5 // pred_region
        %s216 = ssub.s32 %s14, 1
        %s217 = smul.u32 2, %s24
        %p218 = scmp.lt.s32.totalorder %s23, 1
        %s219 = scalar_select %p218, %s23, 1
        %p220 = scmp.lt.s32.totalorder %s217, 1
        %s221 = scalar_select %p220, %s217, 1
        %s222 = smul.addr %s219, 4
        %s223 = sadd.s32 %s221, %s222
        %s224 = smul.addr %s223, 4
        %s225 = scalar_lea.vmem %s0, %s224
        %p226 = pneg %p54
        %p227 = pneg %p51
        %p228 = pneg %p75
        %p229 = pneg %p72
        %p230 = pneg %p96
        %p231 = pneg %p93
        %p232 = pneg %p117
        %p233 = pneg %p114
        %p234 = pneg %p138
        %p235 = pneg %p135
        %p236 = pneg %p166
        %p237 = pneg %p163
        %s238 = sand.u32 %s153, 1
        %s239 = scalar_lea.sflag [#allocation3], %s238
        %s240 = sand.u32 %s153, 1
        %s241 = smul.addr %s240, 8
        %s242 = scalar_lea.vmem [#allocation2], %s241
        %s243 = smul.u32 2, %s24
        %p244 = scmp.lt.s32.totalorder %s23, 1
        %s245 = scalar_select %p244, %s23, 1
        %p246 = scmp.lt.s32.totalorder %s243, 1
        %s247 = scalar_select %p246, %s243, 1
        %s248 = smul.addr %s245, 4
        %s249 = sadd.s32 %s247, %s248
        %s250 = smul.addr %s249, 4
        %s251 = scalar_lea.vmem %s0, %s250
        %s252 = smul.u32 2, %s24
        %s253 = smul.u32 2, %s24
        %v255 = vld [vmem:[%s1] sm:$0xf]
        %v256 = vld [vmem:[%s1 + $0x4] sm:$0xf]
        %v257 = vld [vmem:[%s1 + $0x8] sm:$0xf]
        %v258 = vld [vmem:[%s1 + $0xc] sm:$0xf]
        %v259 = vld [vmem:[%s1 + $0x10] sm:$0xf]
        %v260 = vld [vmem:[%s1 + $0x14] sm:$0xf]
        %v261 = vld [vmem:[%s1 + $0x18] sm:$0xf]
        %v262 = vld [vmem:[%s1 + $0x1c] sm:$0xf]
        %v263 = vld [vmem:[%s1 + $0x20] sm:$0xf]
        %v264 = vld [vmem:[%s1 + $0x24] sm:$0xf]
        %v265 = vld [vmem:[%s1 + $0x28] sm:$0xf]
        %v266 = vld [vmem:[%s1 + $0x2c] sm:$0xf]
        %v267 = vld [vmem:[%s1 + $0x30] sm:$0xf]
        %v268 = vld [vmem:[%s1 + $0x34] sm:$0xf]
        %v269 = vld [vmem:[%s1 + $0x38] sm:$0xf]
        %v270 = vld [vmem:[%s1 + $0x3c] sm:$0xf]
        %v271 = vld [vmem:[%s1 + $0x40] sm:$0xf]
        %v272 = vld [vmem:[%s1 + $0x44] sm:$0xf]
        %v273 = vld [vmem:[%s1 + $0x48] sm:$0xf]
        %v274 = vld [vmem:[%s1 + $0x4c] sm:$0xf]
        %v275 = vld [vmem:[%s1 + $0x50] sm:$0xf]
        %v276 = vld [vmem:[%s1 + $0x54] sm:$0xf]
        %v277 = vld [vmem:[%s1 + $0x58] sm:$0xf]
        %v278 = vld [vmem:[%s1 + $0x5c] sm:$0xf]
        %v279 = vld [vmem:[%s251] sm:$0xff]
        %v280 = vld [vmem:[%s251 + $0x8] sm:$0x33]
        %v281 = vld [vmem:[%s2] sm:$0xff]
        %v282 = vld [vmem:[%s2 + $0x8] sm:$0xff]
        %v283 = vld [vmem:[%s2 + $0x10] sm:$0xff]
        %v284 = vld [vmem:[%s2 + $0x18] sm:$0xff]
        %v285 = vld [vmem:[%s2 + $0x20] sm:$0xff]
        %v286 = vld [vmem:[%s2 + $0x28] sm:$0xff]
        %v287 = vld [vmem:[%s2 + $0x30] sm:$0xff]
        %v288 = vld [vmem:[%s2 + $0x38] sm:$0xff]
        %v289 = vld [vmem:[%s2 + $0x40] sm:$0xff]
        %v290 = vld [vmem:[%s2 + $0x48] sm:$0xff]
        %v291 = vld [vmem:[%s2 + $0x50] sm:$0xff]
        %v292 = vld [vmem:[%s2 + $0x58] sm:$0xff]
        %v293 = vld [vmem:[%s2 + $0x60] sm:$0xff]
        %v294 = vld [vmem:[%s2 + $0x68] sm:$0xff]
        %v295 = vld [vmem:[%s2 + $0x70] sm:$0xff]
        %v296 = vld [vmem:[%s2 + $0x78] sm:$0xff]
        %v297 = vld [vmem:[%s2 + $0x80] sm:$0xff]
        %v298 = vld [vmem:[%s2 + $0x88] sm:$0xff]
        %v299 = vld [vmem:[%s2 + $0x90] sm:$0xff]
        %v300 = vld [vmem:[%s2 + $0x98] sm:$0xff]
        %v301 = vld [vmem:[%s2 + $0xa0] sm:$0xff]
        %v302 = vld [vmem:[%s2 + $0xa8] sm:$0xff]
        %v303 = vld [vmem:[%s2 + $0xb0] sm:$0xff]
        %v304 = vld [vmem:[%s2 + $0xb8] sm:$0xff]
        %306 = vset.pattern.permute.xlu0 0
        %307 = vperm.xlu0 %306, %v281
        %v308 = vpop.permute.xlu0 %307
        %311 = vset.pattern.permute.xlu0 0
        %312 = vperm.xlu0 %311, %v282
        %v313 = vpop.permute.xlu0 %312
        %316 = vset.pattern.permute.xlu0 0
        %317 = vperm.xlu0 %316, %v283
        %v318 = vpop.permute.xlu0 %317
        %321 = vset.pattern.permute.xlu0 0
        %322 = vperm.xlu0 %321, %v284
        %v323 = vpop.permute.xlu0 %322
        %326 = vset.pattern.permute.xlu0 0
        %327 = vperm.xlu0 %326, %v285
        %v328 = vpop.permute.xlu0 %327
        %331 = vset.pattern.permute.xlu0 0
        %332 = vperm.xlu0 %331, %v286
        %v333 = vpop.permute.xlu0 %332
        %336 = vset.pattern.permute.xlu0 0
        %337 = vperm.xlu0 %336, %v287
        %v338 = vpop.permute.xlu0 %337
        %341 = vset.pattern.permute.xlu0 0
        %342 = vperm.xlu0 %341, %v288
        %v343 = vpop.permute.xlu0 %342
        %346 = vset.pattern.permute.xlu0 0
        %347 = vperm.xlu0 %346, %v289
        %v348 = vpop.permute.xlu0 %347
        %351 = vset.pattern.permute.xlu0 0
        %352 = vperm.xlu0 %351, %v290
        %v353 = vpop.permute.xlu0 %352
        %356 = vset.pattern.permute.xlu0 0
        %357 = vperm.xlu0 %356, %v291
        %v358 = vpop.permute.xlu0 %357
        %361 = vset.pattern.permute.xlu0 0
        %362 = vperm.xlu0 %361, %v292
        %v363 = vpop.permute.xlu0 %362
        %366 = vset.pattern.permute.xlu0 0
        %367 = vperm.xlu0 %366, %v293
        %v368 = vpop.permute.xlu0 %367
        %371 = vset.pattern.permute.xlu0 0
        %372 = vperm.xlu0 %371, %v294
        %v373 = vpop.permute.xlu0 %372
        %376 = vset.pattern.permute.xlu0 0
        %377 = vperm.xlu0 %376, %v295
        %v378 = vpop.permute.xlu0 %377
        %381 = vset.pattern.permute.xlu0 0
        %382 = vperm.xlu0 %381, %v296
        %v383 = vpop.permute.xlu0 %382
        %386 = vset.pattern.permute.xlu0 0
        %387 = vperm.xlu0 %386, %v297
        %v388 = vpop.permute.xlu0 %387
        %391 = vset.pattern.permute.xlu0 0
        %392 = vperm.xlu0 %391, %v298
        %v393 = vpop.permute.xlu0 %392
        %396 = vset.pattern.permute.xlu0 0
        %397 = vperm.xlu0 %396, %v299
        %v398 = vpop.permute.xlu0 %397
        %401 = vset.pattern.permute.xlu0 0
        %402 = vperm.xlu0 %401, %v300
        %v403 = vpop.permute.xlu0 %402
        %406 = vset.pattern.permute.xlu0 0
        %407 = vperm.xlu0 %406, %v301
        %v408 = vpop.permute.xlu0 %407
        %411 = vset.pattern.permute.xlu0 0
        %412 = vperm.xlu0 %411, %v302
        %v413 = vpop.permute.xlu0 %412
        %416 = vset.pattern.permute.xlu0 0
        %417 = vperm.xlu0 %416, %v303
        %v418 = vpop.permute.xlu0 %417
        %421 = vset.pattern.permute.xlu0 0
        %422 = vperm.xlu0 %421, %v304
        %v423 = vpop.permute.xlu0 %422
        %v449 = vunpack.c.l.b16 %v255
        %v450 = vunpack.c.l.b16 %v256
        %v451 = vunpack.c.l.b16 %v257
        %v452 = vunpack.c.l.b16 %v258
        %v453 = vunpack.c.l.b16 %v259
        %v454 = vunpack.c.l.b16 %v260
        %v455 = vunpack.c.l.b16 %v261
        %v456 = vunpack.c.l.b16 %v262
        %v457 = vunpack.c.l.b16 %v263
        %v458 = vunpack.c.l.b16 %v264
        %v459 = vunpack.c.l.b16 %v265
        %v460 = vunpack.c.l.b16 %v266
        %v461 = vunpack.c.l.b16 %v267
        %v462 = vunpack.c.l.b16 %v268
        %v463 = vunpack.c.l.b16 %v269
        %v464 = vunpack.c.l.b16 %v270
        %v465 = vunpack.c.l.b16 %v271
        %v466 = vunpack.c.l.b16 %v272
        %v467 = vunpack.c.l.b16 %v273
        %v468 = vunpack.c.l.b16 %v274
        %v469 = vunpack.c.l.b16 %v275
        %v470 = vunpack.c.l.b16 %v276
        %v471 = vunpack.c.l.b16 %v277
        %v472 = vunpack.c.l.b16 %v278
        %v473 = vpack.c.b16 %v450, %v449
        %v474 = vpack.c.b16 %v452, %v451
        %v475 = vpack.c.b16 %v454, %v453
        %v476 = vpack.c.b16 %v456, %v455
        %v477 = vpack.c.b16 %v458, %v457
        %v478 = vpack.c.b16 %v460, %v459
        %v479 = vpack.c.b16 %v462, %v461
        %v480 = vpack.c.b16 %v464, %v463
        %v481 = vpack.c.b16 %v466, %v465
        %v482 = vpack.c.b16 %v468, %v467
        %v483 = vpack.c.b16 %v470, %v469
        %v484 = vpack.c.b16 %v472, %v471
        %v487 = vunpack.c.l.b16 %v279
        %v488 = vunpack.c.h.b16 %v279
        %v489 = vunpack.c.l.b16 %v280
        %v490 = vunpack.c.h.b16 %v280
        %v491 = vpack.c.b16 %v489, %v487
        %v492 = vpack.c.b16 %v490, %v488
        %vm493 = vcmask 97280
        %v495 = vsel %vm493, %v473, 0
        %v498 = vsel %vm493, %v474, 0
        %v501 = vsel %vm493, %v475, 0
        %v504 = vsel %vm493, %v476, 0
        %v507 = vsel %vm493, %v477, 0
        %v510 = vsel %vm493, %v478, 0
        %v513 = vsel %vm493, %v479, 0
        %v516 = vsel %vm493, %v480, 0
        %v519 = vsel %vm493, %v481, 0
        %v522 = vsel %vm493, %v482, 0
        %v525 = vsel %vm493, %v483, 0
        %v528 = vsel %vm493, %v484, 0
        %vm530 = vcmask 1045504
        %v532 = vsel %vm530, %v491, 0
        %v535 = vsel %vm530, %v492, 0
        %537 = vmatprep.subr.bf16.mxu0 0
        %538 = vmatpush1.bf16.msra.mxu0 0
        %539 = vmatprep.subr.bf16.mxu0 0
        %540 = vmatpush1.bf16.msra.mxu0 0
        %541 = vmatprep.subr.bf16.mxu0 0
        %542 = vmatpush1.bf16.msra.mxu0 0
        %543 = vmatprep.subr.bf16.mxu0 0
        %544 = vmatpush1.bf16.msra.mxu0 0
        %545 = vmatprep.subr.bf16.mxu0 0
        %546 = vmatpush1.bf16.msra.mxu0 0
        %547 = vmatprep.subr.bf16.mxu0 0
        %548 = vmatpush1.bf16.msra.mxu0 0
        %549 = vmatprep.subr.bf16.mxu0 0
        %550 = vmatpush1.bf16.msra.mxu0 0
        %551 = vmatprep.subr.bf16.mxu0 %v535
        %552 = vmatpush1.bf16.msra.mxu0 %v532
        %553 = vmatprep.subr.bf16.mxu0 0
        %554 = vmatpush2.bf16.msra.mxu0 0
        %555 = vmatprep.subr.bf16.mxu0 0
        %556 = vmatpush2.bf16.msra.mxu0 0
        %557 = vmatprep.subr.bf16.mxu0 0
        %558 = vmatpush2.bf16.msra.mxu0 0
        %559 = vmatprep.subr.bf16.mxu0 0
        %560 = vmatpush2.bf16.msra.mxu0 0
        %561 = vmatprep.subr.bf16.mxu0 0
        %562 = vmatpush2.bf16.msra.mxu0 0
        %563 = vmatprep.subr.bf16.mxu0 0
        %564 = vmatpush2.bf16.msra.mxu0 0
        %565 = vmatprep.subr.bf16.mxu0 0
        %566 = vmatpush2.bf16.msra.mxu0 0
        %567 = vmatprep.subr.bf16.mxu0 0
        %568 = vmatpush2.bf16.msra.mxu0 0
        %569 = vmatprep.mubr.bf16.mxu0 0
        %570 = vmatmul.mubr.bf16.gmra.mxu0 %v495
        %v571 = vpop.f32.mrf.mxu0
        %v572 = vadd.f32 %v308, %v571
        %v573 = vpop.f32.mrf.mxu0
        %v574 = vadd.f32 %v308, %v573
        %v575 = vpop.f32.mrf.mxu0
        %v576 = vadd.f32 %v313, %v575
        %v577 = vpop.f32.mrf.mxu0
        %v578 = vadd.f32 %v313, %v577
        %579 = vmatprep.mubr.bf16.mxu0 0
        %580 = vmatmul.mubr.bf16.gmra.mxu0 %v498
        %v581 = vpop.f32.mrf.mxu0
        %v582 = vadd.f32 %v318, %v581
        %v583 = vpop.f32.mrf.mxu0
        %v584 = vadd.f32 %v318, %v583
        %v585 = vpop.f32.mrf.mxu0
        %v586 = vadd.f32 %v323, %v585
        %v587 = vpop.f32.mrf.mxu0
        %v588 = vadd.f32 %v323, %v587
        %589 = vmatprep.mubr.bf16.mxu0 0
        %590 = vmatmul.mubr.bf16.gmra.mxu0 %v501
        %v591 = vpop.f32.mrf.mxu0
        %v592 = vadd.f32 %v328, %v591
        %v593 = vpop.f32.mrf.mxu0
        %v594 = vadd.f32 %v328, %v593
        %v595 = vpop.f32.mrf.mxu0
        %v596 = vadd.f32 %v333, %v595
        %v597 = vpop.f32.mrf.mxu0
        %v598 = vadd.f32 %v333, %v597
        %599 = vmatprep.mubr.bf16.mxu0 0
        %600 = vmatmul.mubr.bf16.gmra.mxu0 %v504
        %v601 = vpop.f32.mrf.mxu0
        %v602 = vadd.f32 %v338, %v601
        %v603 = vpop.f32.mrf.mxu0
        %v604 = vadd.f32 %v338, %v603
        %v605 = vpop.f32.mrf.mxu0
        %v606 = vadd.f32 %v343, %v605
        %v607 = vpop.f32.mrf.mxu0
        %v608 = vadd.f32 %v343, %v607
        %609 = vmatprep.mubr.bf16.mxu0 0
        %610 = vmatmul.mubr.bf16.gmra.mxu0 %v507
        %v611 = vpop.f32.mrf.mxu0
        %v612 = vadd.f32 %v348, %v611
        %v613 = vpop.f32.mrf.mxu0
        %v614 = vadd.f32 %v348, %v613
        %v615 = vpop.f32.mrf.mxu0
        %v616 = vadd.f32 %v353, %v615
        %v617 = vpop.f32.mrf.mxu0
        %v618 = vadd.f32 %v353, %v617
        %619 = vmatprep.mubr.bf16.mxu0 0
        %620 = vmatmul.mubr.bf16.gmra.mxu0 %v510
        %v621 = vpop.f32.mrf.mxu0
        %v622 = vadd.f32 %v358, %v621
        %v623 = vpop.f32.mrf.mxu0
        %v624 = vadd.f32 %v358, %v623
        %v625 = vpop.f32.mrf.mxu0
        %v626 = vadd.f32 %v363, %v625
        %v627 = vpop.f32.mrf.mxu0
        %v628 = vadd.f32 %v363, %v627
        %629 = vmatprep.mubr.bf16.mxu0 0
        %630 = vmatmul.mubr.bf16.gmra.mxu0 %v513
        %v631 = vpop.f32.mrf.mxu0
        %v632 = vadd.f32 %v368, %v631
        %v633 = vpop.f32.mrf.mxu0
        %v634 = vadd.f32 %v368, %v633
        %v635 = vpop.f32.mrf.mxu0
        %v636 = vadd.f32 %v373, %v635
        %v637 = vpop.f32.mrf.mxu0
        %v638 = vadd.f32 %v373, %v637
        %639 = vmatprep.mubr.bf16.mxu0 0
        %640 = vmatmul.mubr.bf16.gmra.mxu0 %v516
        %v641 = vpop.f32.mrf.mxu0
        %v642 = vadd.f32 %v378, %v641
        %v643 = vpop.f32.mrf.mxu0
        %v644 = vadd.f32 %v378, %v643
        %v645 = vpop.f32.mrf.mxu0
        %v646 = vadd.f32 %v383, %v645
        %v647 = vpop.f32.mrf.mxu0
        %v648 = vadd.f32 %v383, %v647
        %649 = vmatprep.mubr.bf16.mxu0 0
        %650 = vmatmul.mubr.bf16.gmra.mxu0 %v519
        %v651 = vpop.f32.mrf.mxu0
        %v652 = vadd.f32 %v388, %v651
        %v653 = vpop.f32.mrf.mxu0
        %v654 = vadd.f32 %v388, %v653
        %v655 = vpop.f32.mrf.mxu0
        %v656 = vadd.f32 %v393, %v655
        %v657 = vpop.f32.mrf.mxu0
        %v658 = vadd.f32 %v393, %v657
        %659 = vmatprep.mubr.bf16.mxu0 0
        %660 = vmatmul.mubr.bf16.gmra.mxu0 %v522
        %v661 = vpop.f32.mrf.mxu0
        %v662 = vadd.f32 %v398, %v661
        %v663 = vpop.f32.mrf.mxu0
        %v664 = vadd.f32 %v398, %v663
        %v665 = vpop.f32.mrf.mxu0
        %v666 = vadd.f32 %v403, %v665
        %v667 = vpop.f32.mrf.mxu0
        %v668 = vadd.f32 %v403, %v667
        %669 = vmatprep.mubr.bf16.mxu0 0
        %670 = vmatmul.mubr.bf16.gmra.mxu0 %v525
        %v671 = vpop.f32.mrf.mxu0
        %v672 = vadd.f32 %v408, %v671
        %v673 = vpop.f32.mrf.mxu0
        %v674 = vadd.f32 %v408, %v673
        %v675 = vpop.f32.mrf.mxu0
        %v676 = vadd.f32 %v413, %v675
        %v677 = vpop.f32.mrf.mxu0
        %v678 = vadd.f32 %v413, %v677
        %679 = vmatprep.mubr.bf16.mxu0 0
        %680 = vmatmul.mubr.bf16.gmra.mxu0 %v528
        %v681 = vpop.f32.mrf.mxu0
        %v682 = vadd.f32 %v418, %v681
        %v683 = vpop.f32.mrf.mxu0
        %v684 = vadd.f32 %v418, %v683
        %v685 = vpop.f32.mrf.mxu0
        %v686 = vadd.f32 %v423, %v685
        %v687 = vpop.f32.mrf.mxu0
        %v688 = vadd.f32 %v423, %v687
        %689 = vdwg.mxu0
        %v690 = vmax.f32 %v572, 0.0
        %v691 = vmax.f32 %v574, 0.0
        %v692 = vmax.f32 %v576, 0.0
        %v693 = vmax.f32 %v578, 0.0
        %v694 = vmax.f32 %v582, 0.0
        %v695 = vmax.f32 %v584, 0.0
        %v696 = vmax.f32 %v586, 0.0
        %v697 = vmax.f32 %v588, 0.0
        %v698 = vmax.f32 %v592, 0.0
        %v699 = vmax.f32 %v594, 0.0
        %v700 = vmax.f32 %v596, 0.0
        %v701 = vmax.f32 %v598, 0.0
        %v702 = vmax.f32 %v602, 0.0
        %v703 = vmax.f32 %v604, 0.0
        %v704 = vmax.f32 %v606, 0.0
        %v705 = vmax.f32 %v608, 0.0
        %v706 = vmax.f32 %v612, 0.0
        %v707 = vmax.f32 %v614, 0.0
        %v708 = vmax.f32 %v616, 0.0
        %v709 = vmax.f32 %v618, 0.0
        %v710 = vmax.f32 %v622, 0.0
        %v711 = vmax.f32 %v624, 0.0
        %v712 = vmax.f32 %v626, 0.0
        %v713 = vmax.f32 %v628, 0.0
        %v714 = vmax.f32 %v632, 0.0
        %v715 = vmax.f32 %v634, 0.0
        %v716 = vmax.f32 %v636, 0.0
        %v717 = vmax.f32 %v638, 0.0
        %v718 = vmax.f32 %v642, 0.0
        %v719 = vmax.f32 %v644, 0.0
        %v720 = vmax.f32 %v646, 0.0
        %v721 = vmax.f32 %v648, 0.0
        %v722 = vmax.f32 %v652, 0.0
        %v723 = vmax.f32 %v654, 0.0
        %v724 = vmax.f32 %v656, 0.0
        %v725 = vmax.f32 %v658, 0.0
        %v726 = vmax.f32 %v662, 0.0
        %v727 = vmax.f32 %v664, 0.0
        %v728 = vmax.f32 %v666, 0.0
        %v729 = vmax.f32 %v668, 0.0
        %v730 = vmax.f32 %v672, 0.0
        %v731 = vmax.f32 %v674, 0.0
        %v732 = vmax.f32 %v676, 0.0
        %v733 = vmax.f32 %v678, 0.0
        %v734 = vmax.f32 %v682, 0.0
        %v735 = vmax.f32 %v684, 0.0
        %v736 = vmax.f32 %v686, 0.0
        %v737 = vmax.f32 %v688, 0.0
        %v738 = vld [vmem:[%s3] sm:$0xf]
        %v739 = vpack.c.bf16 %v692, %v690
        %v740 = vpack.c.bf16 %v693, %v691
        %v741 = vpack.c.bf16 %v696, %v694
        %v742 = vpack.c.bf16 %v697, %v695
        %v743 = vpack.c.bf16 %v700, %v698
        %v744 = vpack.c.bf16 %v701, %v699
        %v745 = vpack.c.bf16 %v704, %v702
        %v746 = vpack.c.bf16 %v705, %v703
        %v747 = vpack.c.bf16 %v708, %v706
        %v748 = vpack.c.bf16 %v709, %v707
        %v749 = vpack.c.bf16 %v712, %v710
        %v750 = vpack.c.bf16 %v713, %v711
        %v751 = vpack.c.bf16 %v716, %v714
        %v752 = vpack.c.bf16 %v717, %v715
        %v753 = vpack.c.bf16 %v720, %v718
        %v754 = vpack.c.bf16 %v721, %v719
        %v755 = vpack.c.bf16 %v724, %v722
        %v756 = vpack.c.bf16 %v725, %v723
        %v757 = vpack.c.bf16 %v728, %v726
        %v758 = vpack.c.bf16 %v729, %v727
        %v759 = vpack.c.bf16 %v732, %v730
        %v760 = vpack.c.bf16 %v733, %v731
        %v761 = vpack.c.bf16 %v736, %v734
        %v762 = vpack.c.bf16 %v737, %v735
        %v763 = vld [vmem:[%s4] sm:$0xf]
        %765 = vset.pattern.permute.xlu0 0
        %766 = vperm.xlu0 %765, %v763
        %v767 = vpop.permute.xlu0 %766
        %v771 = vunpack.c.l.s4 1983009808
        %v772 = vunpack.c.0.s8 %v771
        %v773 = vlaneseq
        %v774 = vshrl.u32 %v773, 7
        %v775 = vsub.s32 %v772, %v774
        %v776 = vrot.slane %v738, %v775
        %v777 = vcombine.high %v776, %v776
        %vm779 = vcmask 523264
        %v781 = vsel %vm779, %v777, 0
        %783 = vmatprep.subr.bf16.mxu0 %v754
        %784 = vmatpush1.bf16.msra.mxu0 %v753
        %785 = vmatprep.subr.bf16.mxu0 %v752
        %786 = vmatpush1.bf16.msra.mxu0 %v751
        %787 = vmatprep.subr.bf16.mxu0 %v750
        %788 = vmatpush1.bf16.msra.mxu0 %v749
        %789 = vmatprep.subr.bf16.mxu0 %v748
        %790 = vmatpush1.bf16.msra.mxu0 %v747
        %791 = vmatprep.subr.bf16.mxu0 %v746
        %792 = vmatpush1.bf16.msra.mxu0 %v745
        %793 = vmatprep.subr.bf16.mxu0 %v744
        %794 = vmatpush1.bf16.msra.mxu0 %v743
        %795 = vmatprep.subr.bf16.mxu0 %v742
        %796 = vmatpush1.bf16.msra.mxu0 %v741
        %797 = vmatprep.subr.bf16.mxu0 %v740
        %798 = vmatpush1.bf16.msra.mxu0 %v739
        %799 = vmatprep.subr.bf16.mxu0 0
        %800 = vmatpush2.bf16.msra.mxu0 0
        %801 = vmatprep.subr.bf16.mxu0 0
        %802 = vmatpush2.bf16.msra.mxu0 0
        %803 = vmatprep.subr.bf16.mxu0 0
        %804 = vmatpush2.bf16.msra.mxu0 0
        %805 = vmatprep.subr.bf16.mxu0 0
        %806 = vmatpush2.bf16.msra.mxu0 0
        %807 = vmatprep.subr.bf16.mxu0 %v762
        %808 = vmatpush2.bf16.msra.mxu0 %v761
        %809 = vmatprep.subr.bf16.mxu0 %v760
        %810 = vmatpush2.bf16.msra.mxu0 %v759
        %811 = vmatprep.subr.bf16.mxu0 %v758
        %812 = vmatpush2.bf16.msra.mxu0 %v757
        %813 = vmatprep.subr.bf16.mxu0 %v756
        %814 = vmatpush2.bf16.msra.mxu0 %v755
        %815 = vmatprep.mubr.bf16.mxu0 %v781
        %816 = vmatmul.mubr.bf16.gmra.mxu0 %v776
        %v817 = vpop.f32.mrf.mxu0
        %v818 = vadd.f32 %v767, %v817
        %v819 = vpop.f32.mrf.mxu0
        %v820 = vadd.f32 %v767, %v819
        %v821 = vpop.f32.mrf.mxu0
        %v822 = vpop.f32.mrf.mxu0
        %823 = vdwg.mxu0
        %v826 = vcombine.low %v818, %v820
        %828 = vst [vmem:[%s242] sm:$0xff] %v826
        %s829 = sand.u32 %s153, 1
        %s830 = scalar_lea.sflag [#allocation3], %s829
        %s831 = sand.u32 %s153, 1
        %s832 = smul.addr %s831, 8
        %s833 = scalar_lea.vmem [#allocation2], %s832
        // Predicated region
        $region41: #{tpu_custom_call.1} parent=39 // pred_check
          %p834 = pneg %p163
        $region42: #{tpu_custom_call.1} parent=39 // pred_check_branch
          %836 = sbr.rel (%p834) target = $region44
        $region43: #{tpu_custom_call.1} parent=39 // pred_region
          %s837 = smul.u32 2, %s24
          %s839 = ssub.s32 128, 128
          %840 = vsyncadd %s830, %s839
          %s841 = smul.addr %s23, 2
          %s842 = sadd.s32 %s837, %s841
          %s843 = smul.addr %s842, 64
          %s844 = scalar_lea.hbm %s5, %s843
          %s846 = sshll.u32 %s833, 4
          %s847 = int_to_ptr.vmem [resolvable:$true] %s846
          %849 = dma.vmem_to_hbm [thread:$0]  %s847, 128, %s844, %s830
        $region44: #{tpu_custom_call.1} parent=39 // pred_fallthru
          _
      $region40: #{tpu_custom_call.1} parent=5 // pred_fallthru
        _
      %p850 = scmp.le.s32.totalorder 2, %s14
      // Predicated region
      $region45: #{tpu_custom_call.1} parent=5 // pred_check
        %p851 = pneg %p850
      $region46: #{tpu_custom_call.1} parent=5 // pred_check_branch
        %853 = sbr.rel (%p851) target = $region48
      $region47: #{tpu_custom_call.1} parent=5 // pred_region
        %s854 = ssub.s32 %s14, 2
        // Predicated region
        $region49: #{tpu_custom_call.1} parent=47 // pred_check
          %p855 = pneg %p169
        $region50: #{tpu_custom_call.1} parent=47 // pred_check_branch
          %857 = sbr.rel (%p855) target = $region52
        $region51: #{tpu_custom_call.1} parent=47 // pred_region
          %s858 = sand.u32 %s154, 1
          %s859 = scalar_lea.sflag [#allocation3], %s858
          %s860 = sand.u32 %s154, 1
          %s861 = smul.addr %s860, 8
          %s862 = scalar_lea.vmem [#allocation2], %s861
          %863 = dma.done %s859, 128
        $region52: #{tpu_custom_call.1} parent=47 // pred_fallthru
          _
      $region48: #{tpu_custom_call.1} parent=5 // pred_fallthru
        _
    $region6: #{tpu_custom_call.1} parent=1 // loop_footer
      %s18 = sadd.s32 1, %s14
    $region7: #{tpu_custom_call.1} parent=1 // loop_footer_branch
      %13 = sbr.rel target = $region3
    $region8: #{tpu_custom_call.1} parent=1 // loop_exit
      _
    %864 = vsyncpa [#allocation3], 1
    %s865 = scalar_lea.sflag [#allocation3], 1
    %866 = vsyncpa %s865, 1

</llo_original>
